<compile_context>
chip_gen: v5e
topology: v5e:2x2
jax: 0.10.0
libtpu: 0.0.40
codegen_flags: <defaults>
</compile_context>

<pallas_src>
import functools

import jax
import jax.numpy as jnp
from jax.experimental import pallas as pl
from jax.experimental.pallas import tpu as pltpu

_LANE = 128          # lane width (last dim)
_BF16_SUBLANE = 16   # bf16 packs 2 rows/sublane -> one vreg is (16, 128)
_TM_MAX = 256        # row tile cap once batches get large (MXU-row friendly)


def _round_up(x, m):
    return ((x + m - 1) // m) * m


# ---------------------------------------------------------------------------
# Kernels
# ---------------------------------------------------------------------------
def _siamese_kernel(x1_ref, x2_ref, w1_ref, b1_ref, w2_ref, b2_ref,
                    o1_ref, o2_ref):
    """Both Siamese branches on one (tm, D) row tile; weights shared/resident."""
    w1 = w1_ref[...]
    b1 = b1_ref[...]
    w2 = w2_ref[...]
    b2 = b2_ref[...]

    def branch(x):
        # h = relu(x @ W1 + b1): bf16 operands, f32 accumulate, f32 epilogue.
        h = jnp.dot(x, w1, preferred_element_type=jnp.float32)
        h = jnp.maximum(h + b1, 0.0)
        # out = h @ W2 + b2: cast h back to bf16 for the MXU.
        o = jnp.dot(h.astype(jnp.bfloat16), w2,
                    preferred_element_type=jnp.float32)
        return o + b2

    o1_ref[...] = branch(x1_ref[...]).astype(o1_ref.dtype)
    o2_ref[...] = branch(x2_ref[...]).astype(o2_ref.dtype)


def _embed_kernel(x_ref, w1_ref, b1_ref, w2_ref, b2_ref, o_ref):
    """Single-branch embedding (SiameseNet.get_embedding)."""
    h = jnp.dot(x_ref[...], w1_ref[...], preferred_element_type=jnp.float32)
    h = jnp.maximum(h + b1_ref[...], 0.0)
    o = jnp.dot(h.astype(jnp.bfloat16), w2_ref[...],
                preferred_element_type=jnp.float32)
    o_ref[...] = (o + b2_ref[...]).astype(o_ref.dtype)


# ---------------------------------------------------------------------------
# pallas_call wrappers
# ---------------------------------------------------------------------------
def _weight_specs(d_in, d_hidden, e_pad):
    # Same block for every grid step -> fetched into VMEM once, stays resident.
    return [
        pl.BlockSpec((d_in, d_hidden), lambda i: (0, 0)),
        pl.BlockSpec((1, d_hidden), lambda i: (0, 0)),
        pl.BlockSpec((d_hidden, e_pad), lambda i: (0, 0)),
        pl.BlockSpec((1, e_pad), lambda i: (0, 0)),
    ]


def _vmem_limit(d_in, d_hidden, e_pad, tm, n_branches):
    weight_bytes = (d_in * d_hidden + d_hidden * e_pad) * 2 + (d_hidden + e_pad) * 4
    # Double-buffered row tiles (bf16 in, f32 out) per branch.
    io_bytes = n_branches * 2 * (tm * d_in * 2 + tm * e_pad * 4)
    # f32 intermediates / headroom.
    needed = 2 * (weight_bytes + io_bytes) + 4 * n_branches * tm * d_hidden
    return int(min(max(needed, 8 * 1024 * 1024), 64 * 1024 * 1024))


def _siamese_call(x1f, x2f, w1, b1, w2, b2, *, tm):
    m_pad, d_in = x1f.shape
    d_hidden = w1.shape[1]
    e_pad = w2.shape[1]
    grid_m = m_pad // tm

    row_spec = pl.BlockSpec((tm, d_in), lambda i: (i, 0))
    out_spec = pl.BlockSpec((tm, e_pad), lambda i: (i, 0))

    flops = 2 * (2 * m_pad * d_in * d_hidden + 2 * m_pad * d_hidden * e_pad)
    bytes_accessed = (2 * m_pad * d_in * 2
                      + d_in * d_hidden * 2 + d_hidden * 4
                      + d_hidden * e_pad * 2 + e_pad * 4
                      + 2 * m_pad * e_pad * 4)

    return pl.pallas_call(
        _siamese_kernel,
        out_shape=(jax.ShapeDtypeStruct((m_pad, e_pad), jnp.float32),
                   jax.ShapeDtypeStruct((m_pad, e_pad), jnp.float32)),
        grid=(grid_m,),
        in_specs=[row_spec, row_spec] + _weight_specs(d_in, d_hidden, e_pad),
        out_specs=(out_spec, out_spec),
        compiler_params=pltpu.CompilerParams(
            dimension_semantics=("parallel",),
            vmem_limit_bytes=_vmem_limit(d_in, d_hidden, e_pad, tm, 2)),
        cost_estimate=pl.CostEstimate(
            flops=flops, transcendentals=0, bytes_accessed=bytes_accessed),
    )(x1f, x2f, w1, b1, w2, b2)


def _embed_call(xf, w1, b1, w2, b2, *, tm):
    m_pad, d_in = xf.shape
    d_hidden = w1.shape[1]
    e_pad = w2.shape[1]
    grid_m = m_pad // tm

    flops = 2 * m_pad * d_in * d_hidden + 2 * m_pad * d_hidden * e_pad
    bytes_accessed = (m_pad * d_in * 2
                      + d_in * d_hidden * 2 + d_hidden * 4
                      + d_hidden * e_pad * 2 + e_pad * 4
                      + m_pad * e_pad * 4)

    return pl.pallas_call(
        _embed_kernel,
        out_shape=jax.ShapeDtypeStruct((m_pad, e_pad), jnp.float32),
        grid=(grid_m,),
        in_specs=[pl.BlockSpec((tm, d_in), lambda i: (i, 0))]
                 + _weight_specs(d_in, d_hidden, e_pad),
        out_specs=pl.BlockSpec((tm, e_pad), lambda i: (i, 0)),
        compiler_params=pltpu.CompilerParams(
            dimension_semantics=("parallel",),
            vmem_limit_bytes=_vmem_limit(d_in, d_hidden, e_pad, tm, 1)),
        cost_estimate=pl.CostEstimate(
            flops=flops, transcendentals=0, bytes_accessed=bytes_accessed),
    )(xf, w1, b1, w2, b2)


# ---------------------------------------------------------------------------
# Module-level API (mirrors SiameseNet.forward / get_embedding)
# ---------------------------------------------------------------------------
def _row_tiling(batch):
    m_pad = _round_up(batch, _BF16_SUBLANE)       # bf16 (16,128) packing granule
    tm = m_pad if m_pad <= _TM_MAX else _TM_MAX
    m_pad = _round_up(m_pad, tm)
    return m_pad, tm


def siamese_forward(params, x1, x2, *, d_emb):
    """SiameseNet.forward: (f(x1), f(x2)) with shared weights, one fused call."""
    w1, b1, w2, b2 = params
    batch = x1.shape[0]

    # NCHW flatten, matches torch .view(B, -1); bf16 operands for the MXU.
    x1f = x1.reshape(batch, -1).astype(jnp.bfloat16)
    x2f = x2.reshape(batch, -1).astype(jnp.bfloat16)

    m_pad, tm = _row_tiling(batch)
    if m_pad != batch:
        pad = ((0, m_pad - batch), (0, 0))
        x1f = jnp.pad(x1f, pad)
        x2f = jnp.pad(x2f, pad)

    out1, out2 = _siamese_call(x1f, x2f, w1, b1, w2, b2, tm=tm)
    return out1[:batch, :d_emb], out2[:batch, :d_emb]


def get_embedding(params, x, *, d_emb):
    """SiameseNet.get_embedding: f(x) with the shared embedding net."""
    w1, b1, w2, b2 = params
    batch = x.shape[0]
    xf = x.reshape(batch, -1).astype(jnp.bfloat16)

    m_pad, tm = _row_tiling(batch)
    if m_pad != batch:
        xf = jnp.pad(xf, ((0, m_pad - batch), (0, 0)))

    out = _embed_call(xf, w1, b1, w2, b2, tm=tm)
    return out[:batch, :d_emb]


def init_params(key, d_in, d_hidden, d_emb):
    """One-time parameter prep (done here, NOT per forward call).

    Weights in bf16 (MXU dtype, halves weight DMA), biases in f32, and the
    embedding dim pre-padded to a multiple of 128 with zero columns so the
    kernel's output path is lane-dense with no per-call pad ops.
    """
    k1, k2 = jax.random.split(key)
    e_pad = max(_LANE, _round_up(d_emb, _LANE))

    w1 = (jax.random.normal(k1, (d_in, d_hidden), jnp.float32)
          * (1.0 / jnp.sqrt(d_in))).astype(jnp.bfloat16)
    b1 = jnp.zeros((1, d_hidden), jnp.float32)

    w2_core = (jax.random.normal(k2, (d_hidden, d_emb), jnp.float32)
               * (1.0 / jnp.sqrt(d_hidden)))
    w2 = jnp.zeros((d_hidden, e_pad), jnp.float32).at[:, :d_emb].set(w2_core)
    w2 = w2.astype(jnp.bfloat16)
    b2 = jnp.zeros((1, e_pad), jnp.float32)
    return (w1, b1, w2, b2)


if __name__ == "__main__":
    B, C, H, W = 2, 4, 16, 16          # small NCHW inputs
    D_IN = C * H * W                   # 1024
    D_HID = 128
    D_EMB = 32

    key = jax.random.PRNGKey(0)
    kx1, kx2, kp = jax.random.split(key, 3)
    x1 = jax.random.normal(kx1, (B, C, H, W), jnp.float32)
    x2 = jax.random.normal(kx2, (B, C, H, W), jnp.float32)
    params = init_params(kp, D_IN, D_HID, D_EMB)

    fwd = jax.jit(functools.partial(siamese_forward, d_emb=D_EMB))
    out1, out2 = fwd(params, x1, x2)
    jax.block_until_ready((out1, out2))

    emb = jax.jit(functools.partial(get_embedding, d_emb=D_EMB))
    e1 = emb(params, x1)
    jax.block_until_ready(e1)

    # Reference in plain JAX, mirroring the kernel's dtype path exactly
    # (bf16 operands, f32 accumulation, f32 epilogue).
    def ref_embed(xf, w1, b1, w2, b2):
        h = jnp.dot(xf, w1, preferred_element_type=jnp.float32) + b1
        h = jnp.maximum(h, 0.0)
        return jnp.dot(h.astype(jnp.bfloat16), w2,
                       preferred_element_type=jnp.float32) + b2

    w1, b1, w2, b2 = params
    r1 = ref_embed(x1.reshape(B, -1).astype(jnp.bfloat16),
                   w1, b1, w2, b2)[:, :D_EMB]
    r2 = ref_embed(x2.reshape(B, -1).astype(jnp.bfloat16),
                   w1, b1, w2, b2)[:, :D_EMB]

    assert out1.shape == (B, D_EMB) and out2.shape == (B, D_EMB)
    assert e1.shape == (B, D_EMB)
    assert jnp.allclose(out1, r1, atol=1e-2, rtol=1e-2)
    assert jnp.allclose(out2, r2, atol=1e-2, rtol=1e-2)
    assert jnp.allclose(e1, r1, atol=1e-2, rtol=1e-2)

    print("KERNEL_OK")
</pallas_src>

<mosaic_0001>
module attributes {stable_mosaic.version = 11 : i64} {
  func.func @_siamese_kernel(%arg0: i32, %arg1: memref<16x1024xbf16, #tpu.memory_space<vmem>>, %arg2: memref<16x1024xbf16, #tpu.memory_space<vmem>>, %arg3: memref<1024x128xbf16, #tpu.memory_space<vmem>>, %arg4: memref<1x128xf32, #tpu.memory_space<vmem>>, %arg5: memref<128x128xbf16, #tpu.memory_space<vmem>>, %arg6: memref<1x128xf32, #tpu.memory_space<vmem>>, %arg7: memref<16x128xf32, #tpu.memory_space<vmem>>, %arg8: memref<16x128xf32, #tpu.memory_space<vmem>>) attributes {dimension_semantics = [#tpu.dimension_semantics<parallel>], iteration_bounds = array<i64: 1>, scalar_prefetch = 0 : i64, scratch_operands = 0 : i64, tpu.core_type = #tpu.core_type<tc>, window_params = [{transform_indices = @transform_0, window_bounds = array<i64: 16, 1024>}, {transform_indices = @transform_1, window_bounds = array<i64: 16, 1024>}, {pipeline_mode = #tpu.pipeline_mode<synchronous>, transform_indices = @transform_2, window_bounds = array<i64: 1024, 128>}, {pipeline_mode = #tpu.pipeline_mode<synchronous>, transform_indices = @transform_3, window_bounds = array<i64: 1, 128>}, {pipeline_mode = #tpu.pipeline_mode<synchronous>, transform_indices = @transform_4, window_bounds = array<i64: 128, 128>}, {pipeline_mode = #tpu.pipeline_mode<synchronous>, transform_indices = @transform_5, window_bounds = array<i64: 1, 128>}, {transform_indices = @transform_6, window_bounds = array<i64: 16, 128>}, {transform_indices = @transform_7, window_bounds = array<i64: 16, 128>}]} {
    %c0 = arith.constant 0 : index
    %c0_0 = arith.constant 0 : index
    %0 = vector.load %arg3[%c0, %c0_0] : memref<1024x128xbf16, #tpu.memory_space<vmem>>, vector<1024x128xbf16>
    %c0_1 = arith.constant 0 : index
    %c0_2 = arith.constant 0 : index
    %1 = vector.load %arg4[%c0_1, %c0_2] : memref<1x128xf32, #tpu.memory_space<vmem>>, vector<1x128xf32>
    %c0_3 = arith.constant 0 : index
    %c0_4 = arith.constant 0 : index
    %2 = vector.load %arg5[%c0_3, %c0_4] : memref<128x128xbf16, #tpu.memory_space<vmem>>, vector<128x128xbf16>
    %c0_5 = arith.constant 0 : index
    %c0_6 = arith.constant 0 : index
    %3 = vector.load %arg6[%c0_5, %c0_6] : memref<1x128xf32, #tpu.memory_space<vmem>>, vector<1x128xf32>
    %c0_7 = arith.constant 0 : index
    %c0_8 = arith.constant 0 : index
    %4 = vector.load %arg1[%c0_7, %c0_8] : memref<16x1024xbf16, #tpu.memory_space<vmem>>, vector<16x1024xbf16>
    %cst = arith.constant dense<0.000000e+00> : vector<16x128xf32>
    %5 = tpu.matmul %4, %0, %cst {dimension_numbers = #tpu.dot_dimension_numbers<[1], [0], [0], [1], [0, 0, 1, 1], [], []>} : vector<16x1024xbf16>, vector<1024x128xbf16>, vector<16x128xf32> -> vector<16x128xf32>
    %6 = vector.broadcast %1 : vector<1x128xf32> to vector<16x128xf32>
    %7 = arith.addf %5, %6 : vector<16x128xf32>
    %cst_9 = arith.constant 0.000000e+00 : f32
    %8 = vector.broadcast %cst_9 : f32 to vector<16x128xf32>
    %9 = arith.maximumf %7, %8 : vector<16x128xf32>
    %10 = arith.truncf %9 : vector<16x128xf32> to vector<16x128xbf16>
    %cst_10 = arith.constant dense<0.000000e+00> : vector<16x128xf32>
    %11 = tpu.matmul %10, %2, %cst_10 {dimension_numbers = #tpu.dot_dimension_numbers<[1], [0], [0], [1], [0, 0, 1, 1], [], []>} : vector<16x128xbf16>, vector<128x128xbf16>, vector<16x128xf32> -> vector<16x128xf32>
    %12 = vector.broadcast %3 : vector<1x128xf32> to vector<16x128xf32>
    %13 = arith.addf %11, %12 : vector<16x128xf32>
    %c0_11 = arith.constant 0 : index
    %c0_12 = arith.constant 0 : index
    %14 = vector.load %arg7[%c0_11, %c0_12] : memref<16x128xf32, #tpu.memory_space<vmem>>, vector<16x128xf32>
    tpu.vector_store %arg7[%c0_11, %c0_12], %13 {strides = array<i32>} : memref<16x128xf32, #tpu.memory_space<vmem>>, vector<16x128xf32>,
    %c0_13 = arith.constant 0 : index
    %c0_14 = arith.constant 0 : index
    %15 = vector.load %arg2[%c0_13, %c0_14] : memref<16x1024xbf16, #tpu.memory_space<vmem>>, vector<16x1024xbf16>
    %cst_15 = arith.constant dense<0.000000e+00> : vector<16x128xf32>
    %16 = tpu.matmul %15, %0, %cst_15 {dimension_numbers = #tpu.dot_dimension_numbers<[1], [0], [0], [1], [0, 0, 1, 1], [], []>} : vector<16x1024xbf16>, vector<1024x128xbf16>, vector<16x128xf32> -> vector<16x128xf32>
    %17 = vector.broadcast %1 : vector<1x128xf32> to vector<16x128xf32>
    %18 = arith.addf %16, %17 : vector<16x128xf32>
    %cst_16 = arith.constant 0.000000e+00 : f32
    %19 = vector.broadcast %cst_16 : f32 to vector<16x128xf32>
    %20 = arith.maximumf %18, %19 : vector<16x128xf32>
    %21 = arith.truncf %20 : vector<16x128xf32> to vector<16x128xbf16>
    %cst_17 = arith.constant dense<0.000000e+00> : vector<16x128xf32>
    %22 = tpu.matmul %21, %2, %cst_17 {dimension_numbers = #tpu.dot_dimension_numbers<[1], [0], [0], [1], [0, 0, 1, 1], [], []>} : vector<16x128xbf16>, vector<128x128xbf16>, vector<16x128xf32> -> vector<16x128xf32>
    %23 = vector.broadcast %3 : vector<1x128xf32> to vector<16x128xf32>
    %24 = arith.addf %22, %23 : vector<16x128xf32>
    %c0_18 = arith.constant 0 : index
    %c0_19 = arith.constant 0 : index
    %25 = vector.load %arg8[%c0_18, %c0_19] : memref<16x128xf32, #tpu.memory_space<vmem>>, vector<16x128xf32>
    tpu.vector_store %arg8[%c0_18, %c0_19], %24 {strides = array<i32>} : memref<16x128xf32, #tpu.memory_space<vmem>>, vector<16x128xf32>,
    return
  }
  func.func @transform_0(%arg0: i32) -> (i32, i32) {
    %c0_i32 = arith.constant 0 : i32
    %c0_i32_0 = arith.constant 0 : i32
    return %arg0, %c0_i32 : i32, i32
  }
  func.func @transform_1(%arg0: i32) -> (i32, i32) {
    %c0_i32 = arith.constant 0 : i32
    %c0_i32_0 = arith.constant 0 : i32
    return %arg0, %c0_i32 : i32, i32
  }
  func.func @transform_2(%arg0: i32) -> (i32, i32) {
    %c0_i32 = arith.constant 0 : i32
    %c0_i32_0 = arith.constant 0 : i32
    %c0_i32_1 = arith.constant 0 : i32
    return %c0_i32, %c0_i32_0 : i32, i32
  }
  func.func @transform_3(%arg0: i32) -> (i32, i32) {
    %c0_i32 = arith.constant 0 : i32
    %c0_i32_0 = arith.constant 0 : i32
    %c0_i32_1 = arith.constant 0 : i32
    return %c0_i32, %c0_i32_0 : i32, i32
  }
  func.func @transform_4(%arg0: i32) -> (i32, i32) {
    %c0_i32 = arith.constant 0 : i32
    %c0_i32_0 = arith.constant 0 : i32
    %c0_i32_1 = arith.constant 0 : i32
    return %c0_i32, %c0_i32_0 : i32, i32
  }
  func.func @transform_5(%arg0: i32) -> (i32, i32) {
    %c0_i32 = arith.constant 0 : i32
    %c0_i32_0 = arith.constant 0 : i32
    %c0_i32_1 = arith.constant 0 : i32
    return %c0_i32, %c0_i32_0 : i32, i32
  }
  func.func @transform_6(%arg0: i32) -> (i32, i32) {
    %c0_i32 = arith.constant 0 : i32
    %c0_i32_0 = arith.constant 0 : i32
    return %arg0, %c0_i32 : i32, i32
  }
  func.func @transform_7(%arg0: i32) -> (i32, i32) {
    %c0_i32 = arith.constant 0 : i32
    %c0_i32_0 = arith.constant 0 : i32
    return %arg0, %c0_i32 : i32, i32
  }
}

</mosaic_0001>

<llo_original>
// kernel: siamese_forward.1
$region0: #{siamese_forward.1}
  #allocation0 [shape = 'u32[]', space=smem, size = 0x4, offset = 0x4, fixed_abs, tag = 'smem constant byte address 0x4 - core index']
  #allocation1 [shape = 'u32[72,128]{1,0:T(1,128)}', space=vmem, size = 0x9000, scoped, tag = 'internal scratch']
  %s0 = inlined_call_operand.vmem [shape: bf16[16,1024], index: 0, kind: input, shape index: {}]
  %s1 = inlined_call_operand.vmem [shape: bf16[16,1024], index: 1, kind: input, shape index: {}]
  %s2 = inlined_call_operand.vmem [shape: bf16[1024,128], index: 2, kind: input, shape index: {}]
  %s3 = inlined_call_operand.vmem [shape: f32[1,128], index: 3, kind: input, shape index: {}]
  %s4 = inlined_call_operand.hbm [shape: bf16[128,128], index: 4, kind: input, shape index: {}]
  %s5 = inlined_call_operand.vmem [shape: f32[1,128], index: 5, kind: input, shape index: {}]
  %s6 = inlined_call_operand.vmem [shape: f32[16,128], index: 6, kind: output, shape index: {0}]
  %s7 = inlined_call_operand.vmem [shape: f32[16,128], index: 7, kind: output, shape index: {1}]
  %8 = xla_tuple %s6, %s7
  %s9 = sld [smem:[#allocation0]]
  $region46: #{siamese_forward.1} parent=0
    _
  %s11 = ssub.s32 1, %s9
  %s12 = scalar_select 0, %s11, %s9
  $region1: #{siamese_forward.1} parent=0
    #allocation2 [shape = 'u8[32768]{0}', space=vmem, size = 0x8000, scoped, tag = 'input window, operand 4, single buffered']
    #allocation3 [shape = 's32[1]{0}', space=sflag, size = 0x4, scoped, tag = 'scoped memory for siamese_forward.1']
    %13 = vsyncpa [#allocation3], 0
    // Predicated region
    $region2: #{siamese_forward.1} parent=1 // pred_check
      _
    $region3: #{siamese_forward.1} parent=1 // pred_check_branch
      %15 = sbr.rel (0) target = $region5
    $region4: #{siamese_forward.1} parent=1 // pred_region
      _
    $region5: #{siamese_forward.1} parent=1 // pred_fallthru
      _
    // Predicated region
    $region6: #{siamese_forward.1} parent=1 // pred_check
      _
    $region7: #{siamese_forward.1} parent=1 // pred_check_branch
      %17 = sbr.rel (0) target = $region9
    $region8: #{siamese_forward.1} parent=1 // pred_region
      _
    $region9: #{siamese_forward.1} parent=1 // pred_fallthru
      _
    // Predicated region
    $region10: #{siamese_forward.1} parent=1 // pred_check
      _
    $region11: #{siamese_forward.1} parent=1 // pred_check_branch
      %19 = sbr.rel (0) target = $region13
    $region12: #{siamese_forward.1} parent=1 // pred_region
      _
    $region13: #{siamese_forward.1} parent=1 // pred_fallthru
      _
    // Predicated region
    $region14: #{siamese_forward.1} parent=1 // pred_check
      _
    $region15: #{siamese_forward.1} parent=1 // pred_check_branch
      %21 = sbr.rel (0) target = $region17
    $region16: #{siamese_forward.1} parent=1 // pred_region
      _
    $region17: #{siamese_forward.1} parent=1 // pred_fallthru
      _
    // Predicated region
    $region18: #{siamese_forward.1} parent=1 // pred_check
      _
    $region19: #{siamese_forward.1} parent=1 // pred_check_branch
      %23 = sbr.rel (0) target = $region21
    $region20: #{siamese_forward.1} parent=1 // pred_region
      %25 = vsyncadd [#allocation3], 0
      %s26 = sshll.u32 %s4, 4
      %s27 = int_to_ptr.hbm [resolvable:$true] %s26
      %s28 = sshll.u32 [#allocation2], 4
      %s29 = int_to_ptr.vmem [resolvable:$true] %s28
      %34 = dma.hbm_to_vmem [thread:$0]  %s27, 1024, %s29, [#allocation3], 64, 64, 4
    $region21: #{siamese_forward.1} parent=1 // pred_fallthru
      _
    // Predicated region
    $region22: #{siamese_forward.1} parent=1 // pred_check
      _
    $region23: #{siamese_forward.1} parent=1 // pred_check_branch
      %36 = sbr.rel (0) target = $region25
    $region24: #{siamese_forward.1} parent=1 // pred_region
      _
    $region25: #{siamese_forward.1} parent=1 // pred_fallthru
      _
    // Predicated region
    $region26: #{siamese_forward.1} parent=1 // pred_check
      _
    $region27: #{siamese_forward.1} parent=1 // pred_check_branch
      %38 = sbr.rel (0) target = $region29
    $region28: #{siamese_forward.1} parent=1 // pred_region
      %40 = dma.done [#allocation3], 1024
    $region29: #{siamese_forward.1} parent=1 // pred_fallthru
      _
    %v41 = vld [vmem:[%s2] sm:$0xf]
    %v42 = vld [vmem:[%s2 + $0x4] sm:$0xf]
    %v43 = vld [vmem:[%s2 + $0x8] sm:$0xf]
    %v44 = vld [vmem:[%s2 + $0xc] sm:$0xf]
    %v45 = vld [vmem:[%s2 + $0x10] sm:$0xf]
    %v46 = vld [vmem:[%s2 + $0x14] sm:$0xf]
    %v47 = vld [vmem:[%s2 + $0x18] sm:$0xf]
    %v48 = vld [vmem:[%s2 + $0x1c] sm:$0xf]
    %v49 = vld [vmem:[%s2 + $0x20] sm:$0xf]
    %v50 = vld [vmem:[%s2 + $0x24] sm:$0xf]
    %v51 = vld [vmem:[%s2 + $0x28] sm:$0xf]
    %v52 = vld [vmem:[%s2 + $0x2c] sm:$0xf]
    %v53 = vld [vmem:[%s2 + $0x30] sm:$0xf]
    %v54 = vld [vmem:[%s2 + $0x34] sm:$0xf]
    %v55 = vld [vmem:[%s2 + $0x38] sm:$0xf]
    %v56 = vld [vmem:[%s2 + $0x3c] sm:$0xf]
    %v57 = vld [vmem:[%s2 + $0x40] sm:$0xf]
    %v58 = vld [vmem:[%s2 + $0x44] sm:$0xf]
    %v59 = vld [vmem:[%s2 + $0x48] sm:$0xf]
    %v60 = vld [vmem:[%s2 + $0x4c] sm:$0xf]
    %v61 = vld [vmem:[%s2 + $0x50] sm:$0xf]
    %v62 = vld [vmem:[%s2 + $0x54] sm:$0xf]
    %v63 = vld [vmem:[%s2 + $0x58] sm:$0xf]
    %v64 = vld [vmem:[%s2 + $0x5c] sm:$0xf]
    %v65 = vld [vmem:[%s2 + $0x60] sm:$0xf]
    %v66 = vld [vmem:[%s2 + $0x64] sm:$0xf]
    %v67 = vld [vmem:[%s2 + $0x68] sm:$0xf]
    %v68 = vld [vmem:[%s2 + $0x6c] sm:$0xf]
    %v69 = vld [vmem:[%s2 + $0x70] sm:$0xf]
    %v70 = vld [vmem:[%s2 + $0x74] sm:$0xf]
    %v71 = vld [vmem:[%s2 + $0x78] sm:$0xf]
    %v72 = vld [vmem:[%s2 + $0x7c] sm:$0xf]
    %v73 = vld [vmem:[%s2 + $0x80] sm:$0xf]
    %v74 = vld [vmem:[%s2 + $0x84] sm:$0xf]
    %v75 = vld [vmem:[%s2 + $0x88] sm:$0xf]
    %v76 = vld [vmem:[%s2 + $0x8c] sm:$0xf]
    %v77 = vld [vmem:[%s2 + $0x90] sm:$0xf]
    %v78 = vld [vmem:[%s2 + $0x94] sm:$0xf]
    %v79 = vld [vmem:[%s2 + $0x98] sm:$0xf]
    %v80 = vld [vmem:[%s2 + $0x9c] sm:$0xf]
    %v81 = vld [vmem:[%s2 + $0xa0] sm:$0xf]
    %v82 = vld [vmem:[%s2 + $0xa4] sm:$0xf]
    %v83 = vld [vmem:[%s2 + $0xa8] sm:$0xf]
    %v84 = vld [vmem:[%s2 + $0xac] sm:$0xf]
    %v85 = vld [vmem:[%s2 + $0xb0] sm:$0xf]
    %v86 = vld [vmem:[%s2 + $0xb4] sm:$0xf]
    %v87 = vld [vmem:[%s2 + $0xb8] sm:$0xf]
    %v88 = vld [vmem:[%s2 + $0xbc] sm:$0xf]
    %v89 = vld [vmem:[%s2 + $0xc0] sm:$0xf]
    %v90 = vld [vmem:[%s2 + $0xc4] sm:$0xf]
    %v91 = vld [vmem:[%s2 + $0xc8] sm:$0xf]
    %v92 = vld [vmem:[%s2 + $0xcc] sm:$0xf]
    %v93 = vld [vmem:[%s2 + $0xd0] sm:$0xf]
    %v94 = vld [vmem:[%s2 + $0xd4] sm:$0xf]
    %v95 = vld [vmem:[%s2 + $0xd8] sm:$0xf]
    %v96 = vld [vmem:[%s2 + $0xdc] sm:$0xf]
    %v97 = vld [vmem:[%s2 + $0xe0] sm:$0xf]
    %v98 = vld [vmem:[%s2 + $0xe4] sm:$0xf]
    %v99 = vld [vmem:[%s2 + $0xe8] sm:$0xf]
    %v100 = vld [vmem:[%s2 + $0xec] sm:$0xf]
    %v101 = vld [vmem:[%s2 + $0xf0] sm:$0xf]
    %v102 = vld [vmem:[%s2 + $0xf4] sm:$0xf]
    %v103 = vld [vmem:[%s2 + $0xf8] sm:$0xf]
    %v104 = vld [vmem:[%s2 + $0xfc] sm:$0xf]
    %v105 = vld [vmem:[%s2 + $0x100] sm:$0xf]
    %v106 = vld [vmem:[%s2 + $0x104] sm:$0xf]
    %v107 = vld [vmem:[%s2 + $0x108] sm:$0xf]
    %v108 = vld [vmem:[%s2 + $0x10c] sm:$0xf]
    %v109 = vld [vmem:[%s2 + $0x110] sm:$0xf]
    %v110 = vld [vmem:[%s2 + $0x114] sm:$0xf]
    %v111 = vld [vmem:[%s2 + $0x118] sm:$0xf]
    %v112 = vld [vmem:[%s2 + $0x11c] sm:$0xf]
    %v113 = vld [vmem:[%s2 + $0x120] sm:$0xf]
    %v114 = vld [vmem:[%s2 + $0x124] sm:$0xf]
    %v115 = vld [vmem:[%s2 + $0x128] sm:$0xf]
    %v116 = vld [vmem:[%s2 + $0x12c] sm:$0xf]
    %v117 = vld [vmem:[%s2 + $0x130] sm:$0xf]
    %v118 = vld [vmem:[%s2 + $0x134] sm:$0xf]
    %v119 = vld [vmem:[%s2 + $0x138] sm:$0xf]
    %v120 = vld [vmem:[%s2 + $0x13c] sm:$0xf]
    %v121 = vld [vmem:[%s2 + $0x140] sm:$0xf]
    %v122 = vld [vmem:[%s2 + $0x144] sm:$0xf]
    %v123 = vld [vmem:[%s2 + $0x148] sm:$0xf]
    %v124 = vld [vmem:[%s2 + $0x14c] sm:$0xf]
    %v125 = vld [vmem:[%s2 + $0x150] sm:$0xf]
    %v126 = vld [vmem:[%s2 + $0x154] sm:$0xf]
    %v127 = vld [vmem:[%s2 + $0x158] sm:$0xf]
    %v128 = vld [vmem:[%s2 + $0x15c] sm:$0xf]
    %v129 = vld [vmem:[%s2 + $0x160] sm:$0xf]
    %v130 = vld [vmem:[%s2 + $0x164] sm:$0xf]
    %v131 = vld [vmem:[%s2 + $0x168] sm:$0xf]
    %v132 = vld [vmem:[%s2 + $0x16c] sm:$0xf]
    %v133 = vld [vmem:[%s2 + $0x170] sm:$0xf]
    %v134 = vld [vmem:[%s2 + $0x174] sm:$0xf]
    %v135 = vld [vmem:[%s2 + $0x178] sm:$0xf]
    %v136 = vld [vmem:[%s2 + $0x17c] sm:$0xf]
    %v137 = vld [vmem:[%s2 + $0x180] sm:$0xf]
    %v138 = vld [vmem:[%s2 + $0x184] sm:$0xf]
    %v139 = vld [vmem:[%s2 + $0x188] sm:$0xf]
    %v140 = vld [vmem:[%s2 + $0x18c] sm:$0xf]
    %v141 = vld [vmem:[%s2 + $0x190] sm:$0xf]
    %v142 = vld [vmem:[%s2 + $0x194] sm:$0xf]
    %v143 = vld [vmem:[%s2 + $0x198] sm:$0xf]
    %v144 = vld [vmem:[%s2 + $0x19c] sm:$0xf]
    %v145 = vld [vmem:[%s2 + $0x1a0] sm:$0xf]
    %v146 = vld [vmem:[%s2 + $0x1a4] sm:$0xf]
    %v147 = vld [vmem:[%s2 + $0x1a8] sm:$0xf]
    %v148 = vld [vmem:[%s2 + $0x1ac] sm:$0xf]
    %v149 = vld [vmem:[%s2 + $0x1b0] sm:$0xf]
    %v150 = vld [vmem:[%s2 + $0x1b4] sm:$0xf]
    %v151 = vld [vmem:[%s2 + $0x1b8] sm:$0xf]
    %v152 = vld [vmem:[%s2 + $0x1bc] sm:$0xf]
    %v153 = vld [vmem:[%s2 + $0x1c0] sm:$0xf]
    %v154 = vld [vmem:[%s2 + $0x1c4] sm:$0xf]
    %v155 = vld [vmem:[%s2 + $0x1c8] sm:$0xf]
    %v156 = vld [vmem:[%s2 + $0x1cc] sm:$0xf]
    %v157 = vld [vmem:[%s2 + $0x1d0] sm:$0xf]
    %v158 = vld [vmem:[%s2 + $0x1d4] sm:$0xf]
    %v159 = vld [vmem:[%s2 + $0x1d8] sm:$0xf]
    %v160 = vld [vmem:[%s2 + $0x1dc] sm:$0xf]
    %v161 = vld [vmem:[%s2 + $0x1e0] sm:$0xf]
    %v162 = vld [vmem:[%s2 + $0x1e4] sm:$0xf]
    %v163 = vld [vmem:[%s2 + $0x1e8] sm:$0xf]
    %v164 = vld [vmem:[%s2 + $0x1ec] sm:$0xf]
    %v165 = vld [vmem:[%s2 + $0x1f0] sm:$0xf]
    %v166 = vld [vmem:[%s2 + $0x1f4] sm:$0xf]
    %v167 = vld [vmem:[%s2 + $0x1f8] sm:$0xf]
    %v168 = vld [vmem:[%s2 + $0x1fc] sm:$0xf]
    %v169 = vld [vmem:[%s3] sm:$0x1]
    %v170 = vld [vmem:[#allocation2] sm:$0xf]
    %v171 = vld [vmem:[#allocation2 + $0x4] sm:$0xf]
    %v172 = vld [vmem:[#allocation2 + $0x8] sm:$0xf]
    %v173 = vld [vmem:[#allocation2 + $0xc] sm:$0xf]
    %v174 = vld [vmem:[#allocation2 + $0x10] sm:$0xf]
    %v175 = vld [vmem:[#allocation2 + $0x14] sm:$0xf]
    %v176 = vld [vmem:[#allocation2 + $0x18] sm:$0xf]
    %v177 = vld [vmem:[#allocation2 + $0x1c] sm:$0xf]
    %v178 = vld [vmem:[#allocation2 + $0x20] sm:$0xf]
    %v179 = vld [vmem:[#allocation2 + $0x24] sm:$0xf]
    %v180 = vld [vmem:[#allocation2 + $0x28] sm:$0xf]
    %v181 = vld [vmem:[#allocation2 + $0x2c] sm:$0xf]
    %v182 = vld [vmem:[#allocation2 + $0x30] sm:$0xf]
    %v183 = vld [vmem:[#allocation2 + $0x34] sm:$0xf]
    %v184 = vld [vmem:[#allocation2 + $0x38] sm:$0xf]
    %v185 = vld [vmem:[#allocation2 + $0x3c] sm:$0xf]
    %v186 = vld [vmem:[%s5] sm:$0x1]
    %v187 = vld [vmem:[%s0] sm:$0xff]
    %v188 = vld [vmem:[%s0 + $0x8] sm:$0xff]
    %v189 = vld [vmem:[%s0 + $0x10] sm:$0xff]
    %v190 = vld [vmem:[%s0 + $0x18] sm:$0xff]
    %v191 = vld [vmem:[%s0 + $0x20] sm:$0xff]
    %v192 = vld [vmem:[%s0 + $0x28] sm:$0xff]
    %v193 = vld [vmem:[%s0 + $0x30] sm:$0xff]
    %v194 = vld [vmem:[%s0 + $0x38] sm:$0xff]
    %v196 = vperm.slane %v169, 0
    %v206 = vunpack.c.l.b16 %v187
    %v207 = vunpack.c.h.b16 %v187
    %v208 = vunpack.c.l.b16 %v188
    %v209 = vunpack.c.h.b16 %v188
    %v210 = vunpack.c.l.b16 %v189
    %v211 = vunpack.c.h.b16 %v189
    %v212 = vunpack.c.l.b16 %v190
    %v213 = vunpack.c.h.b16 %v190
    %v214 = vunpack.c.l.b16 %v191
    %v215 = vunpack.c.h.b16 %v191
    %v216 = vunpack.c.l.b16 %v192
    %v217 = vunpack.c.h.b16 %v192
    %v218 = vunpack.c.l.b16 %v193
    %v219 = vunpack.c.h.b16 %v193
    %v220 = vunpack.c.l.b16 %v194
    %v221 = vunpack.c.h.b16 %v194
    %v222 = vpack.c.b16 %v214, %v206
    %v223 = vpack.c.b16 %v215, %v207
    %v224 = vpack.c.b16 %v216, %v208
    %v225 = vpack.c.b16 %v217, %v209
    %v226 = vpack.c.b16 %v218, %v210
    %v227 = vpack.c.b16 %v219, %v211
    %v228 = vpack.c.b16 %v220, %v212
    %v229 = vpack.c.b16 %v221, %v213
    %v366 = vunpack.c.l.b16 %v41
    %v367 = vunpack.c.l.b16 %v42
    %v368 = vunpack.c.l.b16 %v43
    %v369 = vunpack.c.l.b16 %v44
    %v370 = vunpack.c.l.b16 %v45
    %v371 = vunpack.c.l.b16 %v46
    %v372 = vunpack.c.l.b16 %v47
    %v373 = vunpack.c.l.b16 %v48
    %v374 = vunpack.c.l.b16 %v49
    %v375 = vunpack.c.l.b16 %v50
    %v376 = vunpack.c.l.b16 %v51
    %v377 = vunpack.c.l.b16 %v52
    %v378 = vunpack.c.l.b16 %v53
    %v379 = vunpack.c.l.b16 %v54
    %v380 = vunpack.c.l.b16 %v55
    %v381 = vunpack.c.l.b16 %v56
    %v382 = vunpack.c.l.b16 %v57
    %v383 = vunpack.c.l.b16 %v58
    %v384 = vunpack.c.l.b16 %v59
    %v385 = vunpack.c.l.b16 %v60
    %v386 = vunpack.c.l.b16 %v61
    %v387 = vunpack.c.l.b16 %v62
    %v388 = vunpack.c.l.b16 %v63
    %v389 = vunpack.c.l.b16 %v64
    %v390 = vunpack.c.l.b16 %v65
    %v391 = vunpack.c.l.b16 %v66
    %v392 = vunpack.c.l.b16 %v67
    %v393 = vunpack.c.l.b16 %v68
    %v394 = vunpack.c.l.b16 %v69
    %v395 = vunpack.c.l.b16 %v70
    %v396 = vunpack.c.l.b16 %v71
    %v397 = vunpack.c.l.b16 %v72
    %v398 = vunpack.c.l.b16 %v73
    %v399 = vunpack.c.l.b16 %v74
    %v400 = vunpack.c.l.b16 %v75
    %v401 = vunpack.c.l.b16 %v76
    %v402 = vunpack.c.l.b16 %v77
    %v403 = vunpack.c.l.b16 %v78
    %v404 = vunpack.c.l.b16 %v79
    %v405 = vunpack.c.l.b16 %v80
    %v406 = vunpack.c.l.b16 %v81
    %v407 = vunpack.c.l.b16 %v82
    %v408 = vunpack.c.l.b16 %v83
    %v409 = vunpack.c.l.b16 %v84
    %v410 = vunpack.c.l.b16 %v85
    %v411 = vunpack.c.l.b16 %v86
    %v412 = vunpack.c.l.b16 %v87
    %v413 = vunpack.c.l.b16 %v88
    %v414 = vunpack.c.l.b16 %v89
    %v415 = vunpack.c.l.b16 %v90
    %v416 = vunpack.c.l.b16 %v91
    %v417 = vunpack.c.l.b16 %v92
    %v418 = vunpack.c.l.b16 %v93
    %v419 = vunpack.c.l.b16 %v94
    %v420 = vunpack.c.l.b16 %v95
    %v421 = vunpack.c.l.b16 %v96
    %v422 = vunpack.c.l.b16 %v97
    %v423 = vunpack.c.l.b16 %v98
    %v424 = vunpack.c.l.b16 %v99
    %v425 = vunpack.c.l.b16 %v100
    %v426 = vunpack.c.l.b16 %v101
    %v427 = vunpack.c.l.b16 %v102
    %v428 = vunpack.c.l.b16 %v103
    %v429 = vunpack.c.l.b16 %v104
    %v430 = vunpack.c.l.b16 %v105
    %v431 = vunpack.c.l.b16 %v106
    %v432 = vunpack.c.l.b16 %v107
    %v433 = vunpack.c.l.b16 %v108
    %v434 = vunpack.c.l.b16 %v109
    %v435 = vunpack.c.l.b16 %v110
    %v436 = vunpack.c.l.b16 %v111
    %v437 = vunpack.c.l.b16 %v112
    %v438 = vunpack.c.l.b16 %v113
    %v439 = vunpack.c.l.b16 %v114
    %v440 = vunpack.c.l.b16 %v115
    %v441 = vunpack.c.l.b16 %v116
    %v442 = vunpack.c.l.b16 %v117
    %v443 = vunpack.c.l.b16 %v118
    %v444 = vunpack.c.l.b16 %v119
    %v445 = vunpack.c.l.b16 %v120
    %v446 = vunpack.c.l.b16 %v121
    %v447 = vunpack.c.l.b16 %v122
    %v448 = vunpack.c.l.b16 %v123
    %v449 = vunpack.c.l.b16 %v124
    %v450 = vunpack.c.l.b16 %v125
    %v451 = vunpack.c.l.b16 %v126
    %v452 = vunpack.c.l.b16 %v127
    %v453 = vunpack.c.l.b16 %v128
    %v454 = vunpack.c.l.b16 %v129
    %v455 = vunpack.c.l.b16 %v130
    %v456 = vunpack.c.l.b16 %v131
    %v457 = vunpack.c.l.b16 %v132
    %v458 = vunpack.c.l.b16 %v133
    %v459 = vunpack.c.l.b16 %v134
    %v460 = vunpack.c.l.b16 %v135
    %v461 = vunpack.c.l.b16 %v136
    %v462 = vunpack.c.l.b16 %v137
    %v463 = vunpack.c.l.b16 %v138
    %v464 = vunpack.c.l.b16 %v139
    %v465 = vunpack.c.l.b16 %v140
    %v466 = vunpack.c.l.b16 %v141
    %v467 = vunpack.c.l.b16 %v142
    %v468 = vunpack.c.l.b16 %v143
    %v469 = vunpack.c.l.b16 %v144
    %v470 = vunpack.c.l.b16 %v145
    %v471 = vunpack.c.l.b16 %v146
    %v472 = vunpack.c.l.b16 %v147
    %v473 = vunpack.c.l.b16 %v148
    %v474 = vunpack.c.l.b16 %v149
    %v475 = vunpack.c.l.b16 %v150
    %v476 = vunpack.c.l.b16 %v151
    %v477 = vunpack.c.l.b16 %v152
    %v478 = vunpack.c.l.b16 %v153
    %v479 = vunpack.c.l.b16 %v154
    %v480 = vunpack.c.l.b16 %v155
    %v481 = vunpack.c.l.b16 %v156
    %v482 = vunpack.c.l.b16 %v157
    %v483 = vunpack.c.l.b16 %v158
    %v484 = vunpack.c.l.b16 %v159
    %v485 = vunpack.c.l.b16 %v160
    %v486 = vunpack.c.l.b16 %v161
    %v487 = vunpack.c.l.b16 %v162
    %v488 = vunpack.c.l.b16 %v163
    %v489 = vunpack.c.l.b16 %v164
    %v490 = vunpack.c.l.b16 %v165
    %v491 = vunpack.c.l.b16 %v166
    %v492 = vunpack.c.l.b16 %v167
    %v493 = vunpack.c.l.b16 %v168
    %v494 = vpack.c.b16 %v367, %v366
    %v495 = vpack.c.b16 %v369, %v368
    %v496 = vpack.c.b16 %v371, %v370
    %v497 = vpack.c.b16 %v373, %v372
    %v498 = vpack.c.b16 %v375, %v374
    %v499 = vpack.c.b16 %v377, %v376
    %v500 = vpack.c.b16 %v379, %v378
    %v501 = vpack.c.b16 %v381, %v380
    %v502 = vpack.c.b16 %v383, %v382
    %v503 = vpack.c.b16 %v385, %v384
    %v504 = vpack.c.b16 %v387, %v386
    %v505 = vpack.c.b16 %v389, %v388
    %v506 = vpack.c.b16 %v391, %v390
    %v507 = vpack.c.b16 %v393, %v392
    %v508 = vpack.c.b16 %v395, %v394
    %v509 = vpack.c.b16 %v397, %v396
    %v510 = vpack.c.b16 %v399, %v398
    %v511 = vpack.c.b16 %v401, %v400
    %v512 = vpack.c.b16 %v403, %v402
    %v513 = vpack.c.b16 %v405, %v404
    %v514 = vpack.c.b16 %v407, %v406
    %v515 = vpack.c.b16 %v409, %v408
    %v516 = vpack.c.b16 %v411, %v410
    %v517 = vpack.c.b16 %v413, %v412
    %v518 = vpack.c.b16 %v415, %v414
    %v519 = vpack.c.b16 %v417, %v416
    %v520 = vpack.c.b16 %v419, %v418
    %v521 = vpack.c.b16 %v421, %v420
    %v522 = vpack.c.b16 %v423, %v422
    %v523 = vpack.c.b16 %v425, %v424
    %v524 = vpack.c.b16 %v427, %v426
    %v525 = vpack.c.b16 %v429, %v428
    %v526 = vpack.c.b16 %v431, %v430
    %v527 = vpack.c.b16 %v433, %v432
    %v528 = vpack.c.b16 %v435, %v434
    %v529 = vpack.c.b16 %v437, %v436
    %v530 = vpack.c.b16 %v439, %v438
    %v531 = vpack.c.b16 %v441, %v440
    %v532 = vpack.c.b16 %v443, %v442
    %v533 = vpack.c.b16 %v445, %v444
    %v534 = vpack.c.b16 %v447, %v446
    %v535 = vpack.c.b16 %v449, %v448
    %v536 = vpack.c.b16 %v451, %v450
    %v537 = vpack.c.b16 %v453, %v452
    %v538 = vpack.c.b16 %v455, %v454
    %v539 = vpack.c.b16 %v457, %v456
    %v540 = vpack.c.b16 %v459, %v458
    %v541 = vpack.c.b16 %v461, %v460
    %v542 = vpack.c.b16 %v463, %v462
    %v543 = vpack.c.b16 %v465, %v464
    %v544 = vpack.c.b16 %v467, %v466
    %v545 = vpack.c.b16 %v469, %v468
    %v546 = vpack.c.b16 %v471, %v470
    %v547 = vpack.c.b16 %v473, %v472
    %v548 = vpack.c.b16 %v475, %v474
    %v549 = vpack.c.b16 %v477, %v476
    %v550 = vpack.c.b16 %v479, %v478
    %v551 = vpack.c.b16 %v481, %v480
    %v552 = vpack.c.b16 %v483, %v482
    %v553 = vpack.c.b16 %v485, %v484
    %v554 = vpack.c.b16 %v487, %v486
    %v555 = vpack.c.b16 %v489, %v488
    %v556 = vpack.c.b16 %v491, %v490
    %v557 = vpack.c.b16 %v493, %v492
    %622 = vmatpush.bf16.msra.mxu0 %v501
    %623 = vmatpush.bf16.msra.mxu0 %v500
    %624 = vmatpush.bf16.msra.mxu0 %v499
    %625 = vmatpush.bf16.msra.mxu0 %v498
    %626 = vmatpush.bf16.msra.mxu0 %v497
    %627 = vmatpush.bf16.msra.mxu0 %v496
    %628 = vmatpush.bf16.msra.mxu0 %v495
    %629 = vmatpush.bf16.msra.mxu0 %v494
    %630 = vmatmul.bf16.gmra.mxu0 %v222
    %v631 = vpop.f32.mrf.mxu0
    %v632 = vadd.f32 %v196, %v631
    %v633 = vpop.f32.mrf.mxu0
    %v634 = vadd.f32 %v196, %v633
    %635 = vdwg.mxu0
    %636 = vmatpush.bf16.msra.mxu0 %v509
    %637 = vmatpush.bf16.msra.mxu0 %v508
    %638 = vmatpush.bf16.msra.mxu0 %v507
    %639 = vmatpush.bf16.msra.mxu0 %v506
    %640 = vmatpush.bf16.msra.mxu0 %v505
    %641 = vmatpush.bf16.msra.mxu0 %v504
    %642 = vmatpush.bf16.msra.mxu0 %v503
    %643 = vmatpush.bf16.msra.mxu0 %v502
    %644 = vmatmul.bf16.gmra.mxu0 %v223
    %v645 = vpop.f32.mrf.mxu0
    %v646 = vadd.f32 %v632, %v645
    %v647 = vpop.f32.mrf.mxu0
    %v648 = vadd.f32 %v634, %v647
    %649 = vdwg.mxu0
    %650 = vmatpush.bf16.msra.mxu0 %v517
    %651 = vmatpush.bf16.msra.mxu0 %v516
    %652 = vmatpush.bf16.msra.mxu0 %v515
    %653 = vmatpush.bf16.msra.mxu0 %v514
    %654 = vmatpush.bf16.msra.mxu0 %v513
    %655 = vmatpush.bf16.msra.mxu0 %v512
    %656 = vmatpush.bf16.msra.mxu0 %v511
    %657 = vmatpush.bf16.msra.mxu0 %v510
    %658 = vmatmul.bf16.gmra.mxu0 %v224
    %v659 = vpop.f32.mrf.mxu0
    %v660 = vadd.f32 %v646, %v659
    %v661 = vpop.f32.mrf.mxu0
    %v662 = vadd.f32 %v648, %v661
    %663 = vdwg.mxu0
    %664 = vmatpush.bf16.msra.mxu0 %v525
    %665 = vmatpush.bf16.msra.mxu0 %v524
    %666 = vmatpush.bf16.msra.mxu0 %v523
    %667 = vmatpush.bf16.msra.mxu0 %v522
    %668 = vmatpush.bf16.msra.mxu0 %v521
    %669 = vmatpush.bf16.msra.mxu0 %v520
    %670 = vmatpush.bf16.msra.mxu0 %v519
    %671 = vmatpush.bf16.msra.mxu0 %v518
    %672 = vmatmul.bf16.gmra.mxu0 %v225
    %v673 = vpop.f32.mrf.mxu0
    %v674 = vadd.f32 %v660, %v673
    %v675 = vpop.f32.mrf.mxu0
    %v676 = vadd.f32 %v662, %v675
    %677 = vdwg.mxu0
    %678 = vmatpush.bf16.msra.mxu0 %v533
    %679 = vmatpush.bf16.msra.mxu0 %v532
    %680 = vmatpush.bf16.msra.mxu0 %v531
    %681 = vmatpush.bf16.msra.mxu0 %v530
    %682 = vmatpush.bf16.msra.mxu0 %v529
    %683 = vmatpush.bf16.msra.mxu0 %v528
    %684 = vmatpush.bf16.msra.mxu0 %v527
    %685 = vmatpush.bf16.msra.mxu0 %v526
    %686 = vmatmul.bf16.gmra.mxu0 %v226
    %v687 = vpop.f32.mrf.mxu0
    %v688 = vadd.f32 %v674, %v687
    %v689 = vpop.f32.mrf.mxu0
    %v690 = vadd.f32 %v676, %v689
    %691 = vdwg.mxu0
    %692 = vmatpush.bf16.msra.mxu0 %v541
    %693 = vmatpush.bf16.msra.mxu0 %v540
    %694 = vmatpush.bf16.msra.mxu0 %v539
    %695 = vmatpush.bf16.msra.mxu0 %v538
    %696 = vmatpush.bf16.msra.mxu0 %v537
    %697 = vmatpush.bf16.msra.mxu0 %v536
    %698 = vmatpush.bf16.msra.mxu0 %v535
    %699 = vmatpush.bf16.msra.mxu0 %v534
    %700 = vmatmul.bf16.gmra.mxu0 %v227
    %v701 = vpop.f32.mrf.mxu0
    %v702 = vadd.f32 %v688, %v701
    %v703 = vpop.f32.mrf.mxu0
    %v704 = vadd.f32 %v690, %v703
    %705 = vdwg.mxu0
    %706 = vmatpush.bf16.msra.mxu0 %v549
    %707 = vmatpush.bf16.msra.mxu0 %v548
    %708 = vmatpush.bf16.msra.mxu0 %v547
    %709 = vmatpush.bf16.msra.mxu0 %v546
    %710 = vmatpush.bf16.msra.mxu0 %v545
    %711 = vmatpush.bf16.msra.mxu0 %v544
    %712 = vmatpush.bf16.msra.mxu0 %v543
    %713 = vmatpush.bf16.msra.mxu0 %v542
    %714 = vmatmul.bf16.gmra.mxu0 %v228
    %v715 = vpop.f32.mrf.mxu0
    %v716 = vadd.f32 %v702, %v715
    %v717 = vpop.f32.mrf.mxu0
    %v718 = vadd.f32 %v704, %v717
    %719 = vdwg.mxu0
    %720 = vmatpush.bf16.msra.mxu0 %v557
    %721 = vmatpush.bf16.msra.mxu0 %v556
    %722 = vmatpush.bf16.msra.mxu0 %v555
    %723 = vmatpush.bf16.msra.mxu0 %v554
    %724 = vmatpush.bf16.msra.mxu0 %v553
    %725 = vmatpush.bf16.msra.mxu0 %v552
    %726 = vmatpush.bf16.msra.mxu0 %v551
    %727 = vmatpush.bf16.msra.mxu0 %v550
    %728 = vmatmul.bf16.gmra.mxu0 %v229
    %v729 = vpop.f32.mrf.mxu0
    %v730 = vadd.f32 %v716, %v729
    %v731 = vpop.f32.mrf.mxu0
    %v732 = vadd.f32 %v718, %v731
    %733 = vdwg.mxu0
    %v734 = vmax.f32 %v730, 0.0
    %v735 = vmax.f32 %v732, 0.0
    %v736 = vpack.c.bf16 %v735, %v734
    %v738 = vperm.slane %v186, 0
    %v756 = vunpack.c.l.b16 %v170
    %v757 = vunpack.c.l.b16 %v171
    %v758 = vunpack.c.l.b16 %v172
    %v759 = vunpack.c.l.b16 %v173
    %v760 = vunpack.c.l.b16 %v174
    %v761 = vunpack.c.l.b16 %v175
    %v762 = vunpack.c.l.b16 %v176
    %v763 = vunpack.c.l.b16 %v177
    %v764 = vunpack.c.l.b16 %v178
    %v765 = vunpack.c.l.b16 %v179
    %v766 = vunpack.c.l.b16 %v180
    %v767 = vunpack.c.l.b16 %v181
    %v768 = vunpack.c.l.b16 %v182
    %v769 = vunpack.c.l.b16 %v183
    %v770 = vunpack.c.l.b16 %v184
    %v771 = vunpack.c.l.b16 %v185
    %v772 = vpack.c.b16 %v757, %v756
    %v773 = vpack.c.b16 %v759, %v758
    %v774 = vpack.c.b16 %v761, %v760
    %v775 = vpack.c.b16 %v763, %v762
    %v776 = vpack.c.b16 %v765, %v764
    %v777 = vpack.c.b16 %v767, %v766
    %v778 = vpack.c.b16 %v769, %v768
    %v779 = vpack.c.b16 %v771, %v770
    %788 = vmatpush.bf16.msra.mxu0 %v779
    %789 = vmatpush.bf16.msra.mxu0 %v778
    %790 = vmatpush.bf16.msra.mxu0 %v777
    %791 = vmatpush.bf16.msra.mxu0 %v776
    %792 = vmatpush.bf16.msra.mxu0 %v775
    %793 = vmatpush.bf16.msra.mxu0 %v774
    %794 = vmatpush.bf16.msra.mxu0 %v773
    %795 = vmatpush.bf16.msra.mxu0 %v772
    %796 = vmatmul.bf16.gmra.mxu0 %v736
    %v797 = vpop.f32.mrf.mxu0
    %v798 = vadd.f32 %v738, %v797
    %v799 = vpop.f32.mrf.mxu0
    %v800 = vadd.f32 %v738, %v799
    %801 = vdwg.mxu0
    %802 = vst [vmem:[%s6] sm:$0xff] %v798
    %803 = vst [vmem:[%s6 + $0x8] sm:$0xff] %v800
    %v804 = vld [vmem:[%s1] sm:$0xff]
    %v805 = vld [vmem:[%s1 + $0x8] sm:$0xff]
    %v806 = vld [vmem:[%s1 + $0x10] sm:$0xff]
    %v807 = vld [vmem:[%s1 + $0x18] sm:$0xff]
    %v808 = vld [vmem:[%s1 + $0x20] sm:$0xff]
    %v809 = vld [vmem:[%s1 + $0x28] sm:$0xff]
    %v810 = vld [vmem:[%s1 + $0x30] sm:$0xff]
    %v811 = vld [vmem:[%s1 + $0x38] sm:$0xff]
    %v820 = vunpack.c.l.b16 %v804
    %v821 = vunpack.c.h.b16 %v804
    %v822 = vunpack.c.l.b16 %v805
    %v823 = vunpack.c.h.b16 %v805
    %v824 = vunpack.c.l.b16 %v806
    %v825 = vunpack.c.h.b16 %v806
    %v826 = vunpack.c.l.b16 %v807
    %v827 = vunpack.c.h.b16 %v807
    %v828 = vunpack.c.l.b16 %v808
    %v829 = vunpack.c.h.b16 %v808
    %v830 = vunpack.c.l.b16 %v809
    %v831 = vunpack.c.h.b16 %v809
    %v832 = vunpack.c.l.b16 %v810
    %v833 = vunpack.c.h.b16 %v810
    %v834 = vunpack.c.l.b16 %v811
    %v835 = vunpack.c.h.b16 %v811
    %v836 = vpack.c.b16 %v828, %v820
    %v837 = vpack.c.b16 %v829, %v821
    %v838 = vpack.c.b16 %v830, %v822
    %v839 = vpack.c.b16 %v831, %v823
    %v840 = vpack.c.b16 %v832, %v824
    %v841 = vpack.c.b16 %v833, %v825
    %v842 = vpack.c.b16 %v834, %v826
    %v843 = vpack.c.b16 %v835, %v827
    %852 = vmatpush.bf16.msra.mxu0 %v501
    %853 = vmatpush.bf16.msra.mxu0 %v500
    %854 = vmatpush.bf16.msra.mxu0 %v499
    %855 = vmatpush.bf16.msra.mxu0 %v498
    %856 = vmatpush.bf16.msra.mxu0 %v497
    %857 = vmatpush.bf16.msra.mxu0 %v496
    %858 = vmatpush.bf16.msra.mxu0 %v495
    %859 = vmatpush.bf16.msra.mxu0 %v494
    %860 = vmatmul.bf16.gmra.mxu0 %v836
    %v861 = vpop.f32.mrf.mxu0
    %v862 = vadd.f32 %v196, %v861
    %v863 = vpop.f32.mrf.mxu0
    %v864 = vadd.f32 %v196, %v863
    %865 = vdwg.mxu0
    %866 = vmatpush.bf16.msra.mxu0 %v509
    %867 = vmatpush.bf16.msra.mxu0 %v508
    %868 = vmatpush.bf16.msra.mxu0 %v507
    %869 = vmatpush.bf16.msra.mxu0 %v506
    %870 = vmatpush.bf16.msra.mxu0 %v505
    %871 = vmatpush.bf16.msra.mxu0 %v504
    %872 = vmatpush.bf16.msra.mxu0 %v503
    %873 = vmatpush.bf16.msra.mxu0 %v502
    %874 = vmatmul.bf16.gmra.mxu0 %v837
    %v875 = vpop.f32.mrf.mxu0
    %v876 = vadd.f32 %v862, %v875
    %v877 = vpop.f32.mrf.mxu0
    %v878 = vadd.f32 %v864, %v877
    %879 = vdwg.mxu0
    %880 = vmatpush.bf16.msra.mxu0 %v517
    %881 = vmatpush.bf16.msra.mxu0 %v516
    %882 = vmatpush.bf16.msra.mxu0 %v515
    %883 = vmatpush.bf16.msra.mxu0 %v514
    %884 = vmatpush.bf16.msra.mxu0 %v513
    %885 = vmatpush.bf16.msra.mxu0 %v512
    %886 = vmatpush.bf16.msra.mxu0 %v511
    %887 = vmatpush.bf16.msra.mxu0 %v510
    %888 = vmatmul.bf16.gmra.mxu0 %v838
    %v889 = vpop.f32.mrf.mxu0
    %v890 = vadd.f32 %v876, %v889
    %v891 = vpop.f32.mrf.mxu0
    %v892 = vadd.f32 %v878, %v891
    %893 = vdwg.mxu0
    %894 = vmatpush.bf16.msra.mxu0 %v525
    %895 = vmatpush.bf16.msra.mxu0 %v524
    %896 = vmatpush.bf16.msra.mxu0 %v523
    %897 = vmatpush.bf16.msra.mxu0 %v522
    %898 = vmatpush.bf16.msra.mxu0 %v521
    %899 = vmatpush.bf16.msra.mxu0 %v520
    %900 = vmatpush.bf16.msra.mxu0 %v519
    %901 = vmatpush.bf16.msra.mxu0 %v518
    %902 = vmatmul.bf16.gmra.mxu0 %v839
    %v903 = vpop.f32.mrf.mxu0
    %v904 = vadd.f32 %v890, %v903
    %v905 = vpop.f32.mrf.mxu0
    %v906 = vadd.f32 %v892, %v905
    %907 = vdwg.mxu0
    %908 = vmatpush.bf16.msra.mxu0 %v533
    %909 = vmatpush.bf16.msra.mxu0 %v532
    %910 = vmatpush.bf16.msra.mxu0 %v531
    %911 = vmatpush.bf16.msra.mxu0 %v530
    %912 = vmatpush.bf16.msra.mxu0 %v529
    %913 = vmatpush.bf16.msra.mxu0 %v528
    %914 = vmatpush.bf16.msra.mxu0 %v527
    %915 = vmatpush.bf16.msra.mxu0 %v526
    %916 = vmatmul.bf16.gmra.mxu0 %v840
    %v917 = vpop.f32.mrf.mxu0
    %v918 = vadd.f32 %v904, %v917
    %v919 = vpop.f32.mrf.mxu0
    %v920 = vadd.f32 %v906, %v919
    %921 = vdwg.mxu0
    %922 = vmatpush.bf16.msra.mxu0 %v541
    %923 = vmatpush.bf16.msra.mxu0 %v540
    %924 = vmatpush.bf16.msra.mxu0 %v539
    %925 = vmatpush.bf16.msra.mxu0 %v538
    %926 = vmatpush.bf16.msra.mxu0 %v537
    %927 = vmatpush.bf16.msra.mxu0 %v536
    %928 = vmatpush.bf16.msra.mxu0 %v535
    %929 = vmatpush.bf16.msra.mxu0 %v534
    %930 = vmatmul.bf16.gmra.mxu0 %v841
    %v931 = vpop.f32.mrf.mxu0
    %v932 = vadd.f32 %v918, %v931
    %v933 = vpop.f32.mrf.mxu0
    %v934 = vadd.f32 %v920, %v933
    %935 = vdwg.mxu0
    %936 = vmatpush.bf16.msra.mxu0 %v549
    %937 = vmatpush.bf16.msra.mxu0 %v548
    %938 = vmatpush.bf16.msra.mxu0 %v547
    %939 = vmatpush.bf16.msra.mxu0 %v546
    %940 = vmatpush.bf16.msra.mxu0 %v545
    %941 = vmatpush.bf16.msra.mxu0 %v544
    %942 = vmatpush.bf16.msra.mxu0 %v543
    %943 = vmatpush.bf16.msra.mxu0 %v542
    %944 = vmatmul.bf16.gmra.mxu0 %v842
    %v945 = vpop.f32.mrf.mxu0
    %v946 = vadd.f32 %v932, %v945
    %v947 = vpop.f32.mrf.mxu0
    %v948 = vadd.f32 %v934, %v947
    %949 = vdwg.mxu0
    %950 = vmatpush.bf16.msra.mxu0 %v557
    %951 = vmatpush.bf16.msra.mxu0 %v556
    %952 = vmatpush.bf16.msra.mxu0 %v555
    %953 = vmatpush.bf16.msra.mxu0 %v554
    %954 = vmatpush.bf16.msra.mxu0 %v553
    %955 = vmatpush.bf16.msra.mxu0 %v552
    %956 = vmatpush.bf16.msra.mxu0 %v551
    %957 = vmatpush.bf16.msra.mxu0 %v550
    %958 = vmatmul.bf16.gmra.mxu0 %v843
    %v959 = vpop.f32.mrf.mxu0
    %v960 = vadd.f32 %v946, %v959
    %v961 = vpop.f32.mrf.mxu0
    %v962 = vadd.f32 %v948, %v961
    %963 = vdwg.mxu0
    %v964 = vmax.f32 %v960, 0.0
    %v965 = vmax.f32 %v962, 0.0
    %v966 = vpack.c.bf16 %v965, %v964
    %967 = vmatpush.bf16.msra.mxu0 %v779
    %968 = vmatpush.bf16.msra.mxu0 %v778
    %969 = vmatpush.bf16.msra.mxu0 %v777
    %970 = vmatpush.bf16.msra.mxu0 %v776
    %971 = vmatpush.bf16.msra.mxu0 %v775
    %972 = vmatpush.bf16.msra.mxu0 %v774
    %973 = vmatpush.bf16.msra.mxu0 %v773
    %974 = vmatpush.bf16.msra.mxu0 %v772
    %975 = vmatmul.bf16.gmra.mxu0 %v966
    %v976 = vpop.f32.mrf.mxu0
    %v977 = vadd.f32 %v738, %v976
    %v978 = vpop.f32.mrf.mxu0
    %v979 = vadd.f32 %v738, %v978
    %980 = vdwg.mxu0
    %981 = vst [vmem:[%s7] sm:$0xff] %v977
    %982 = vst [vmem:[%s7 + $0x8] sm:$0xff] %v979
    // Predicated region
    $region30: #{siamese_forward.1} parent=1 // pred_check
      _
    $region31: #{siamese_forward.1} parent=1 // pred_check_branch
      %984 = sbr.rel (0) target = $region33
    $region32: #{siamese_forward.1} parent=1 // pred_region
      _
    $region33: #{siamese_forward.1} parent=1 // pred_fallthru
      _
    // Predicated region
    $region34: #{siamese_forward.1} parent=1 // pred_check
      _
    $region35: #{siamese_forward.1} parent=1 // pred_check_branch
      %986 = sbr.rel (0) target = $region37
    $region36: #{siamese_forward.1} parent=1 // pred_region
      _
    $region37: #{siamese_forward.1} parent=1 // pred_fallthru
      _
    // Predicated region
    $region38: #{siamese_forward.1} parent=1 // pred_check
      _
    $region39: #{siamese_forward.1} parent=1 // pred_check_branch
      %988 = sbr.rel (0) target = $region41
    $region40: #{siamese_forward.1} parent=1 // pred_region
      _
    $region41: #{siamese_forward.1} parent=1 // pred_fallthru
      _
    // Predicated region
    $region42: #{siamese_forward.1} parent=1 // pred_check
      _
    $region43: #{siamese_forward.1} parent=1 // pred_check_branch
      %990 = sbr.rel (0) target = $region45
    $region44: #{siamese_forward.1} parent=1 // pred_region
      _
    $region45: #{siamese_forward.1} parent=1 // pred_fallthru
      _
    %991 = vsyncpa [#allocation3], 1

</llo_original>
